<compile_context>
chip_gen: v7x
topology: tpu7x:2x2x1
jax: 0.10.0
libtpu: 0.0.40
codegen_flags: <defaults>
</compile_context>

<pallas_src>
import jax
import jax.numpy as jnp
from jax import lax
from jax.experimental import pallas as pl
from jax.experimental.pallas import tpu as pltpu

EPS = 1e-5
NEG_SLOPE = 0.2

K_IN = 1080            # input features (kept unpadded; full-K block)
D1, D2 = 256, 128
D3, D3_PAD = 64, 128   # pad 64 -> 128 lanes (exact: zero cols/rows)
OUT = 2                # output stored transposed as (2, B)

DEFAULT_TILE_B = 512


def _round_up(n, m):
    return ((n + m - 1) // m) * m


def _tc_per_chip():
    """2 TensorCores per chip on v7x, else 1.  Best-effort detection."""
    try:
        kind = jax.devices()[0].device_kind.lower()
    except Exception:
        return 1
    return 2 if ("v7" in kind or "tpu7" in kind) else 1


def _lrelu(h):
    # max(h, 0.2*h) == LeakyReLU(0.2) for both signs of h.
    return jnp.maximum(h, NEG_SLOPE * h)


def _fold_bn(w, b, gamma, beta, mean, var):
    """Fold eval-mode BatchNorm1d into the preceding Linear (in f32)."""
    scale = gamma * lax.rsqrt(var + EPS)          # (1, C)
    w_f = w * scale                               # (in, C) * (1, C)
    b_f = (b - mean) * scale + beta               # (1, C)
    return w_f, b_f


def _fold_and_pad(params):
    """Fold BN into weights, pad the 64-wide layer, build the transposed
    last layer, cast weights to bf16.  Zero padding is exact: padded columns
    give h = 0 + 0, leaky(0) = 0, and matching zero weight entries of the
    next layer contribute nothing."""
    (w1, b1, g1, be1, m1, v1,
     w2, b2, g2, be2, m2, v2,
     w3, b3, g3, be3, m3, v3,
     w4, b4) = params

    w1f, b1f = _fold_bn(w1, b1, g1, be1, m1, v1)
    w2f, b2f = _fold_bn(w2, b2, g2, be2, m2, v2)
    w3f, b3f = _fold_bn(w3, b3, g3, be3, m3, v3)

    w3p = jnp.pad(w3f, ((0, 0), (0, D3_PAD - D3)))
    b3p = jnp.pad(b3f, ((0, 0), (0, D3_PAD - D3)))

    # Last layer stored transposed: (64, 2) -> (2, 64) -> (2, 128) zero-padded.
    w4t = jnp.pad(w4.T, ((0, 0), (0, D3_PAD - D3)))
    b4t = b4.reshape(OUT, 1)

    ws = tuple(w.astype(jnp.bfloat16) for w in (w1f, w2f, w3p, w4t))
    bs = (b1f, b2f, b3p, b4t)                     # biases stay f32
    return ws, bs


def prepare_params(params):
    """Hoistable parameter prep; call once and keep the result device-resident
    when serving tiny batches so the fold/pad/cast doesn't repeat per call."""
    return _fold_and_pad(params)


def mlp_kernel(x_ref,
               w1_ref, b1_ref, w2_ref, b2_ref, w3_ref, b3_ref,
               w4t_ref, b4t_ref, o_ref):
    # fc_1 (+ folded fc_1_bn) + LeakyReLU.
    # x arrives as f32; the bf16 cast happens here (VPU, hides under MXU/DMA).
    x = x_ref[...].astype(jnp.bfloat16)
    h = jnp.dot(x, w1_ref[...], preferred_element_type=jnp.float32)
    h = _lrelu(h + b1_ref[...])

    # fc_2 (+ folded fc_2_bn) + LeakyReLU
    h = jnp.dot(h.astype(jnp.bfloat16), w2_ref[...],
                preferred_element_type=jnp.float32)
    h = _lrelu(h + b2_ref[...])

    # fc_2b (+ folded fc_2b_bn) + LeakyReLU  (width padded 64 -> 128)
    h = jnp.dot(h.astype(jnp.bfloat16), w3_ref[...],
                preferred_element_type=jnp.float32)
    h = _lrelu(h + b3_ref[...])

    # fc_3 computed transposed: (2, 128) . (tile_b, 128)^T -> (2, tile_b)
    # so the store is tiny and lane-dense (batch on lanes), no 2->128 padding.
    y_t = lax.dot_general(w4t_ref[...], h.astype(jnp.bfloat16),
                          dimension_numbers=(((1,), (1,)), ((), ())),
                          preferred_element_type=jnp.float32)
    o_ref[...] = y_t + b4t_ref[...]


def linear_policy_bn_deep(x, params, *, tile_b=None, prepared=False):
    """x: (B, 1080) f32.  Returns (angle, throttle), each shape (B,).

    If tile_b is given explicitly it should be a multiple of 128 (or cover
    the whole padded batch) so the transposed output store stays lane-dense.
    """
    B = x.shape[0]
    ws, bs = params if prepared else _fold_and_pad(params)
    w1, w2, w3, w4t = ws
    b1, b2, b3, b4t = bs

    if tile_b is None:
        n_tc = _tc_per_chip()
        if B <= DEFAULT_TILE_B:
            if n_tc >= 2 and B >= 256:
                # v7x: keep >= 2 grid steps so both TensorCores get work.
                b_pad = _round_up(B, 256)
                tile_b = b_pad // 2          # multiple of 128
            else:
                b_pad = _round_up(max(B, 1), 8)
                tile_b = b_pad               # single tile, no grid overhead
        else:
            tile_b = DEFAULT_TILE_B
            b_pad = _round_up(B, tile_b)
    else:
        b_pad = _round_up(B, tile_b)

    grid = (b_pad // tile_b,)

    # Only pad batch rows when needed (no column pad, no dtype cast -> no
    # extra HBM round trip of x in the common aligned-batch case).
    x_in = x if b_pad == B else jnp.pad(x, ((0, b_pad - B), (0, 0)))

    flops = 2 * b_pad * (K_IN * D1 + D1 * D2 + D2 * D3_PAD + D3_PAD * OUT)
    bytes_accessed = (
        b_pad * K_IN * 4                         # x read once as f32
        + sum(int(w.size) * 2 for w in ws)       # bf16 weights, fetched once
        + sum(int(b.size) * 4 for b in bs)       # f32 biases
        + OUT * b_pad * 4                        # transposed output
    )

    const = lambda i: (0, 0)           # weights/biases resident across grid
    out = pl.pallas_call(
        mlp_kernel,
        out_shape=jax.ShapeDtypeStruct((OUT, b_pad), jnp.float32),
        grid=grid,
        in_specs=[
            pl.BlockSpec((tile_b, K_IN), lambda i: (i, 0)),   # x tile (f32)
            pl.BlockSpec((K_IN, D1), const),
            pl.BlockSpec((1, D1), const),
            pl.BlockSpec((D1, D2), const),
            pl.BlockSpec((1, D2), const),
            pl.BlockSpec((D2, D3_PAD), const),
            pl.BlockSpec((1, D3_PAD), const),
            pl.BlockSpec((OUT, D3_PAD), const),
            pl.BlockSpec((OUT, 1), const),
        ],
        out_specs=pl.BlockSpec((OUT, tile_b), lambda i: (0, i)),
        compiler_params=pltpu.CompilerParams(
            dimension_semantics=("parallel",),
            vmem_limit_bytes=32 << 20),
        cost_estimate=pl.CostEstimate(
            flops=flops, transcendentals=0, bytes_accessed=bytes_accessed),
    )(x_in, w1, b1, w2, b2, w3, b3, w4t, b4t)

    return out[0, :B], out[1, :B]


def make_params(key):
    """Deterministic synthetic parameters matching the PyTorch module shapes."""
    dims_in = [1080, 256, 128, 64]
    dims_out = [256, 128, 64, 2]
    params = []
    keys = jax.random.split(key, 32)
    ki = 0

    def nxt():
        nonlocal ki
        k = keys[ki]
        ki += 1
        return k

    for li, (din, dout) in enumerate(zip(dims_in, dims_out)):
        # Linear weight stored directly as (in, out); PyTorch stores (out, in)
        # and computes x @ W.T -- identical math for synthetic random init.
        bound = 1.0 / jnp.sqrt(din)
        w = jax.random.uniform(nxt(), (din, dout), jnp.float32, -bound, bound)
        b = jax.random.uniform(nxt(), (1, dout), jnp.float32, -bound, bound)
        params += [w, b]
        if li < 3:  # BatchNorm1d params for the three hidden layers
            gamma = jax.random.uniform(nxt(), (1, dout), jnp.float32, 0.5, 1.5)
            beta = jax.random.uniform(nxt(), (1, dout), jnp.float32, -0.1, 0.1)
            rmean = jax.random.uniform(nxt(), (1, dout), jnp.float32, -0.5, 0.5)
            rvar = jax.random.uniform(nxt(), (1, dout), jnp.float32, 0.5, 1.5)
            params += [gamma, beta, rmean, rvar]
    return params


def reference_f32(x, params):
    """Pure-JAX f32 reference of the original module (un-quantized)."""
    (w1, b1, g1, be1, m1, v1,
     w2, b2, g2, be2, m2, v2,
     w3, b3, g3, be3, m3, v3,
     w4, b4) = params
    dot = lambda a, b: jnp.dot(a, b, precision=lax.Precision.HIGHEST)
    h = dot(x, w1) + b1
    h = (h - m1) / jnp.sqrt(v1 + EPS) * g1 + be1
    h = jnp.where(h >= 0, h, NEG_SLOPE * h)
    h = dot(h, w2) + b2
    h = (h - m2) / jnp.sqrt(v2 + EPS) * g2 + be2
    h = jnp.where(h >= 0, h, NEG_SLOPE * h)
    h = dot(h, w3) + b3
    h = (h - m3) / jnp.sqrt(v3 + EPS) * g3 + be3
    h = jnp.where(h >= 0, h, NEG_SLOPE * h)
    y = dot(h, w4) + b4
    return y[:, 0], y[:, 1]


def reference_quantized(x, params):
    """Reference applying the SAME fold/pad/bf16 quantization as the kernel
    (in-kernel bf16 cast of x and activations, bf16 weights, f32 accumulate),
    isolating kernel correctness from the intended quantization."""
    ws, bs = _fold_and_pad(params)
    w1, w2, w3, w4t = (w.astype(jnp.float32) for w in ws)
    b1, b2, b3, b4t = bs
    q = lambda a: a.astype(jnp.bfloat16).astype(jnp.float32)
    dot = lambda a, b: jnp.dot(q(a), b, precision=lax.Precision.HIGHEST)
    h = _lrelu(dot(x, w1) + b1)
    h = _lrelu(dot(h, w2) + b2)
    h = _lrelu(dot(h, w3) + b3)
    y_t = jnp.dot(w4t, q(h).T, precision=lax.Precision.HIGHEST) + b4t  # (2, B)
    return y_t[0], y_t[1]


if __name__ == "__main__":
    key = jax.random.PRNGKey(0)
    kx, kp = jax.random.split(key)
    B = 8
    x = jax.random.normal(kx, (B, K_IN), jnp.float32)
    params = make_params(kp)

    angle, throttle = linear_policy_bn_deep(x, params)
    jax.block_until_ready((angle, throttle))

    assert angle.shape == (B,) and throttle.shape == (B,)

    # Strict check against a reference using identical (folded, padded,
    # bf16-quantized) parameters -- verifies the kernel math itself,
    # including the unpadded K=1080 contraction and the transposed output.
    qa, qt = reference_quantized(x, params)
    assert jnp.allclose(angle, qa, atol=2e-3, rtol=2e-3)
    assert jnp.allclose(throttle, qt, atol=2e-3, rtol=2e-3)

    # Loose sanity check against the original full-f32 module semantics
    # (difference is only the intended bf16 weight/activation quantization).
    ra, rt = reference_f32(x, params)
    assert jnp.max(jnp.abs(angle - ra)) < 5e-2
    assert jnp.max(jnp.abs(throttle - rt)) < 5e-2

    print("KERNEL_OK")
</pallas_src>

<mosaic_0001>
module attributes {stable_mosaic.version = 11 : i64} {
  func.func @mlp_kernel(%arg0: i32, %arg1: memref<8x1080xf32, #tpu.memory_space<vmem>>, %arg2: memref<1080x256xbf16, #tpu.memory_space<vmem>>, %arg3: memref<1x256xf32, #tpu.memory_space<vmem>>, %arg4: memref<256x128xbf16, #tpu.memory_space<vmem>>, %arg5: memref<1x128xf32, #tpu.memory_space<vmem>>, %arg6: memref<128x128xbf16, #tpu.memory_space<vmem>>, %arg7: memref<1x128xf32, #tpu.memory_space<vmem>>, %arg8: memref<2x128xbf16, #tpu.memory_space<vmem>>, %arg9: memref<2x1xf32, #tpu.memory_space<vmem>>, %arg10: memref<2x8xf32, #tpu.memory_space<vmem>>) attributes {dimension_semantics = [#tpu.dimension_semantics<parallel>], iteration_bounds = array<i64: 1>, scalar_prefetch = 0 : i64, scratch_operands = 0 : i64, tpu.core_type = #tpu.core_type<tc>, window_params = [{transform_indices = @transform_0, window_bounds = array<i64: 8, 1080>}, {pipeline_mode = #tpu.pipeline_mode<synchronous>, transform_indices = @transform_1, window_bounds = array<i64: 1080, 256>}, {pipeline_mode = #tpu.pipeline_mode<synchronous>, transform_indices = @transform_2, window_bounds = array<i64: 1, 256>}, {pipeline_mode = #tpu.pipeline_mode<synchronous>, transform_indices = @transform_3, window_bounds = array<i64: 256, 128>}, {pipeline_mode = #tpu.pipeline_mode<synchronous>, transform_indices = @transform_4, window_bounds = array<i64: 1, 128>}, {pipeline_mode = #tpu.pipeline_mode<synchronous>, transform_indices = @transform_5, window_bounds = array<i64: 128, 128>}, {pipeline_mode = #tpu.pipeline_mode<synchronous>, transform_indices = @transform_6, window_bounds = array<i64: 1, 128>}, {pipeline_mode = #tpu.pipeline_mode<synchronous>, transform_indices = @transform_7, window_bounds = array<i64: 2, 128>}, {pipeline_mode = #tpu.pipeline_mode<synchronous>, transform_indices = @transform_8, window_bounds = array<i64: 2, 1>}, {transform_indices = @transform_9, window_bounds = array<i64: 2, 8>}]} {
    %c0 = arith.constant 0 : index
    %c0_0 = arith.constant 0 : index
    %0 = vector.load %arg1[%c0, %c0_0] : memref<8x1080xf32, #tpu.memory_space<vmem>>, vector<8x1080xf32>
    %1 = arith.truncf %0 : vector<8x1080xf32> to vector<8x1080xbf16>
    %c0_1 = arith.constant 0 : index
    %c0_2 = arith.constant 0 : index
    %2 = vector.load %arg2[%c0_1, %c0_2] : memref<1080x256xbf16, #tpu.memory_space<vmem>>, vector<1080x256xbf16>
    %cst = arith.constant dense<0.000000e+00> : vector<8x256xf32>
    %3 = tpu.matmul %1, %2, %cst {dimension_numbers = #tpu.dot_dimension_numbers<[1], [0], [0], [1], [0, 0, 1, 1], [], []>} : vector<8x1080xbf16>, vector<1080x256xbf16>, vector<8x256xf32> -> vector<8x256xf32>
    %c0_3 = arith.constant 0 : index
    %c0_4 = arith.constant 0 : index
    %4 = vector.load %arg3[%c0_3, %c0_4] : memref<1x256xf32, #tpu.memory_space<vmem>>, vector<1x256xf32>
    %5 = vector.broadcast %4 : vector<1x256xf32> to vector<8x256xf32>
    %6 = arith.addf %3, %5 : vector<8x256xf32>
    %cst_5 = arith.constant 2.000000e-01 : f32
    %7 = vector.broadcast %cst_5 : f32 to vector<8x256xf32>
    %8 = arith.mulf %7, %6 : vector<8x256xf32>
    %9 = arith.maximumf %6, %8 : vector<8x256xf32>
    %10 = arith.truncf %9 : vector<8x256xf32> to vector<8x256xbf16>
    %c0_6 = arith.constant 0 : index
    %c0_7 = arith.constant 0 : index
    %11 = vector.load %arg4[%c0_6, %c0_7] : memref<256x128xbf16, #tpu.memory_space<vmem>>, vector<256x128xbf16>
    %cst_8 = arith.constant dense<0.000000e+00> : vector<8x128xf32>
    %12 = tpu.matmul %10, %11, %cst_8 {dimension_numbers = #tpu.dot_dimension_numbers<[1], [0], [0], [1], [0, 0, 1, 1], [], []>} : vector<8x256xbf16>, vector<256x128xbf16>, vector<8x128xf32> -> vector<8x128xf32>
    %c0_9 = arith.constant 0 : index
    %c0_10 = arith.constant 0 : index
    %13 = vector.load %arg5[%c0_9, %c0_10] : memref<1x128xf32, #tpu.memory_space<vmem>>, vector<1x128xf32>
    %14 = vector.broadcast %13 : vector<1x128xf32> to vector<8x128xf32>
    %15 = arith.addf %12, %14 : vector<8x128xf32>
    %cst_11 = arith.constant 2.000000e-01 : f32
    %16 = vector.broadcast %cst_11 : f32 to vector<8x128xf32>
    %17 = arith.mulf %16, %15 : vector<8x128xf32>
    %18 = arith.maximumf %15, %17 : vector<8x128xf32>
    %19 = arith.truncf %18 : vector<8x128xf32> to vector<8x128xbf16>
    %c0_12 = arith.constant 0 : index
    %c0_13 = arith.constant 0 : index
    %20 = vector.load %arg6[%c0_12, %c0_13] : memref<128x128xbf16, #tpu.memory_space<vmem>>, vector<128x128xbf16>
    %cst_14 = arith.constant dense<0.000000e+00> : vector<8x128xf32>
    %21 = tpu.matmul %19, %20, %cst_14 {dimension_numbers = #tpu.dot_dimension_numbers<[1], [0], [0], [1], [0, 0, 1, 1], [], []>} : vector<8x128xbf16>, vector<128x128xbf16>, vector<8x128xf32> -> vector<8x128xf32>
    %c0_15 = arith.constant 0 : index
    %c0_16 = arith.constant 0 : index
    %22 = vector.load %arg7[%c0_15, %c0_16] : memref<1x128xf32, #tpu.memory_space<vmem>>, vector<1x128xf32>
    %23 = vector.broadcast %22 : vector<1x128xf32> to vector<8x128xf32>
    %24 = arith.addf %21, %23 : vector<8x128xf32>
    %cst_17 = arith.constant 2.000000e-01 : f32
    %25 = vector.broadcast %cst_17 : f32 to vector<8x128xf32>
    %26 = arith.mulf %25, %24 : vector<8x128xf32>
    %27 = arith.maximumf %24, %26 : vector<8x128xf32>
    %c0_18 = arith.constant 0 : index
    %c0_19 = arith.constant 0 : index
    %28 = vector.load %arg8[%c0_18, %c0_19] : memref<2x128xbf16, #tpu.memory_space<vmem>>, vector<2x128xbf16>
    %29 = arith.truncf %27 : vector<8x128xf32> to vector<8x128xbf16>
    %cst_20 = arith.constant dense<0.000000e+00> : vector<2x8xf32>
    %30 = tpu.matmul %28, %29, %cst_20 {dimension_numbers = #tpu.dot_dimension_numbers<[1], [1], [0], [0], [0, 0, 1, 0], [], []>} : vector<2x128xbf16>, vector<8x128xbf16>, vector<2x8xf32> -> vector<2x8xf32>
    %c0_21 = arith.constant 0 : index
    %c0_22 = arith.constant 0 : index
    %31 = vector.load %arg9[%c0_21, %c0_22] : memref<2x1xf32, #tpu.memory_space<vmem>>, vector<2x1xf32>
    %32 = vector.broadcast %31 : vector<2x1xf32> to vector<2x8xf32>
    %33 = arith.addf %30, %32 : vector<2x8xf32>
    %c0_23 = arith.constant 0 : index
    %c0_24 = arith.constant 0 : index
    %34 = vector.load %arg10[%c0_23, %c0_24] : memref<2x8xf32, #tpu.memory_space<vmem>>, vector<2x8xf32>
    tpu.vector_store %arg10[%c0_23, %c0_24], %33 {strides = array<i32>} : memref<2x8xf32, #tpu.memory_space<vmem>>, vector<2x8xf32>,
    return
  }
  func.func @transform_0(%arg0: i32) -> (i32, i32) {
    %c0_i32 = arith.constant 0 : i32
    %c0_i32_0 = arith.constant 0 : i32
    return %arg0, %c0_i32 : i32, i32
  }
  func.func @transform_1(%arg0: i32) -> (i32, i32) {
    %c0_i32 = arith.constant 0 : i32
    %c0_i32_0 = arith.constant 0 : i32
    %c0_i32_1 = arith.constant 0 : i32
    return %c0_i32, %c0_i32_0 : i32, i32
  }
  func.func @transform_2(%arg0: i32) -> (i32, i32) {
    %c0_i32 = arith.constant 0 : i32
    %c0_i32_0 = arith.constant 0 : i32
    %c0_i32_1 = arith.constant 0 : i32
    return %c0_i32, %c0_i32_0 : i32, i32
  }
  func.func @transform_3(%arg0: i32) -> (i32, i32) {
    %c0_i32 = arith.constant 0 : i32
    %c0_i32_0 = arith.constant 0 : i32
    %c0_i32_1 = arith.constant 0 : i32
    return %c0_i32, %c0_i32_0 : i32, i32
  }
  func.func @transform_4(%arg0: i32) -> (i32, i32) {
    %c0_i32 = arith.constant 0 : i32
    %c0_i32_0 = arith.constant 0 : i32
    %c0_i32_1 = arith.constant 0 : i32
    return %c0_i32, %c0_i32_0 : i32, i32
  }
  func.func @transform_5(%arg0: i32) -> (i32, i32) {
    %c0_i32 = arith.constant 0 : i32
    %c0_i32_0 = arith.constant 0 : i32
    %c0_i32_1 = arith.constant 0 : i32
    return %c0_i32, %c0_i32_0 : i32, i32
  }
  func.func @transform_6(%arg0: i32) -> (i32, i32) {
    %c0_i32 = arith.constant 0 : i32
    %c0_i32_0 = arith.constant 0 : i32
    %c0_i32_1 = arith.constant 0 : i32
    return %c0_i32, %c0_i32_0 : i32, i32
  }
  func.func @transform_7(%arg0: i32) -> (i32, i32) {
    %c0_i32 = arith.constant 0 : i32
    %c0_i32_0 = arith.constant 0 : i32
    %c0_i32_1 = arith.constant 0 : i32
    return %c0_i32, %c0_i32_0 : i32, i32
  }
  func.func @transform_8(%arg0: i32) -> (i32, i32) {
    %c0_i32 = arith.constant 0 : i32
    %c0_i32_0 = arith.constant 0 : i32
    %c0_i32_1 = arith.constant 0 : i32
    return %c0_i32, %c0_i32_0 : i32, i32
  }
  func.func @transform_9(%arg0: i32) -> (i32, i32) {
    %c0_i32 = arith.constant 0 : i32
    %c0_i32_0 = arith.constant 0 : i32
    return %c0_i32, %arg0 : i32, i32
  }
}

</mosaic_0001>

<llo_original>
// kernel: tpu_custom_call.1
$region0: #{tpu_custom_call.1}
  #allocation0 [shape = 'u32[]', space=smem, size = 0x4, offset = 0x4, fixed_abs, tag = 'smem constant byte address 0x4 - core index']
  #allocation1 [shape = 'u32[144,128]{1,0:T(1,128)}', space=vmem, size = 0x12000, scoped, tag = 'internal scratch']
  %s0 = inlined_call_operand.hbm [shape: f32[8,1080], index: 0, kind: input, shape index: {}]
  %s1 = inlined_call_operand.hbm [shape: bf16[1080,256], index: 1, kind: input, shape index: {}]
  %s2 = inlined_call_operand.vmem [shape: f32[1,256], index: 2, kind: input, shape index: {}]
  %s3 = inlined_call_operand.hbm [shape: bf16[256,128], index: 3, kind: input, shape index: {}]
  %s4 = inlined_call_operand.vmem [shape: f32[1,128], index: 4, kind: input, shape index: {}]
  %s5 = inlined_call_operand.hbm [shape: bf16[128,128], index: 5, kind: input, shape index: {}]
  %s6 = inlined_call_operand.vmem [shape: f32[1,128], index: 6, kind: input, shape index: {}]
  %s7 = inlined_call_operand.vmem [shape: bf16[2,128], index: 7, kind: input, shape index: {}]
  %s8 = inlined_call_operand.vmem [shape: f32[2,1], index: 8, kind: input, shape index: {}]
  %s9 = inlined_call_operand.hbm [shape: f32[2,8], index: 9, kind: output, shape index: {}]
  %s10 = sld [smem:[#allocation0]]
  $region62: #{tpu_custom_call.1} parent=0
    _
  %s12 = ssub.s32 1, %s10
  %s13 = scalar_select 0, %s12, %s10
  $region1: #{tpu_custom_call.1} parent=0
    #allocation2 [shape = 'u8[36864]{0}', space=vmem, size = 0x9000, scoped, tag = 'input window, operand 0, single buffered']
    #allocation3 [shape = 's32[1]{0}', space=sflag, size = 0x4, scoped, tag = 'scoped memory for tpu_custom_call.1']
    #allocation4 [shape = 's32[1]{0}', space=sflag, size = 0x4, scoped, tag = 'scoped memory for tpu_custom_call.1']
    #allocation5 [shape = 'u8[552960]{0}', space=vmem, size = 0x87000, scoped, tag = 'input window, operand 1, single buffered']
    #allocation6 [shape = 's32[1]{0}', space=sflag, size = 0x4, scoped, tag = 'scoped memory for tpu_custom_call.1']
    #allocation7 [shape = 'u8[65536]{0}', space=vmem, size = 0x10000, scoped, tag = 'input window, operand 3, single buffered']
    #allocation8 [shape = 'u8[32768]{0}', space=vmem, size = 0x8000, scoped, tag = 'input window, operand 5, single buffered']
    #allocation9 [shape = 's32[1]{0}', space=sflag, size = 0x4, scoped, tag = 'scoped memory for tpu_custom_call.1']
    #allocation10 [shape = 'u8[1024]{0}', space=vmem, size = 0x400, scoped, tag = 'output window, operand 0, single buffered']
    %14 = vsyncpa [#allocation3], 0
    %15 = vsyncpa [#allocation6], 0
    %16 = vsyncpa [#allocation9], 0
    %17 = vsyncpa [#allocation4], 0
    // Predicated region
    $region2: #{tpu_custom_call.1} parent=1 // pred_check
      _
    $region3: #{tpu_custom_call.1} parent=1 // pred_check_branch
      %19 = sbr.rel (0) target = $region5
    $region4: #{tpu_custom_call.1} parent=1 // pred_region
      %s21 = ssub.s32 1152, 1152
      %22 = vsyncadd [#allocation3], %s21
      %s24 = sshll.u32 [#allocation2], 4
      %s25 = int_to_ptr.vmem [resolvable:$true] %s24
      %27 = dma.hbm_to_vmem [thread:$0]  %s0, 1152, %s25, [#allocation3]
    $region5: #{tpu_custom_call.1} parent=1 // pred_fallthru
      _
    // Predicated region
    $region6: #{tpu_custom_call.1} parent=1 // pred_check
      _
    $region7: #{tpu_custom_call.1} parent=1 // pred_check_branch
      %29 = sbr.rel (0) target = $region9
    $region8: #{tpu_custom_call.1} parent=1 // pred_region
      %s31 = ssub.s32 17280, 17280
      %32 = vsyncadd [#allocation6], %s31
      %s33 = sshll.u32 [#allocation5], 4
      %s34 = int_to_ptr.vmem [resolvable:$true] %s33
      %39 = dma.hbm_to_vmem [thread:$0]  %s1, 17280, %s34, [#allocation6], 128, 128, 8
    $region9: #{tpu_custom_call.1} parent=1 // pred_fallthru
      _
    // Predicated region
    $region10: #{tpu_custom_call.1} parent=1 // pred_check
      _
    $region11: #{tpu_custom_call.1} parent=1 // pred_check_branch
      %41 = sbr.rel (0) target = $region13
    $region12: #{tpu_custom_call.1} parent=1 // pred_region
      _
    $region13: #{tpu_custom_call.1} parent=1 // pred_fallthru
      _
    // Predicated region
    $region14: #{tpu_custom_call.1} parent=1 // pred_check
      _
    $region15: #{tpu_custom_call.1} parent=1 // pred_check_branch
      %43 = sbr.rel (0) target = $region17
    $region16: #{tpu_custom_call.1} parent=1 // pred_region
      %s45 = ssub.s32 2048, 2048
      %46 = vsyncadd [#allocation6], %s45
      %s47 = sshll.u32 [#allocation7], 4
      %s48 = int_to_ptr.vmem [resolvable:$true] %s47
      %53 = dma.hbm_to_vmem [thread:$0]  %s3, 2048, %s48, [#allocation6], 64, 64, 4
    $region17: #{tpu_custom_call.1} parent=1 // pred_fallthru
      _
    // Predicated region
    $region18: #{tpu_custom_call.1} parent=1 // pred_check
      _
    $region19: #{tpu_custom_call.1} parent=1 // pred_check_branch
      %55 = sbr.rel (0) target = $region21
    $region20: #{tpu_custom_call.1} parent=1 // pred_region
      _
    $region21: #{tpu_custom_call.1} parent=1 // pred_fallthru
      _
    // Predicated region
    $region22: #{tpu_custom_call.1} parent=1 // pred_check
      _
    $region23: #{tpu_custom_call.1} parent=1 // pred_check_branch
      %57 = sbr.rel (0) target = $region25
    $region24: #{tpu_custom_call.1} parent=1 // pred_region
      %s59 = ssub.s32 1024, 1024
      %60 = vsyncadd [#allocation9], %s59
      %s61 = sshll.u32 [#allocation8], 4
      %s62 = int_to_ptr.vmem [resolvable:$true] %s61
      %67 = dma.hbm_to_vmem [thread:$0]  %s5, 1024, %s62, [#allocation9], 64, 64, 4
    $region25: #{tpu_custom_call.1} parent=1 // pred_fallthru
      _
    // Predicated region
    $region26: #{tpu_custom_call.1} parent=1 // pred_check
      _
    $region27: #{tpu_custom_call.1} parent=1 // pred_check_branch
      %69 = sbr.rel (0) target = $region29
    $region28: #{tpu_custom_call.1} parent=1 // pred_region
      _
    $region29: #{tpu_custom_call.1} parent=1 // pred_fallthru
      _
    // Predicated region
    $region30: #{tpu_custom_call.1} parent=1 // pred_check
      _
    $region31: #{tpu_custom_call.1} parent=1 // pred_check_branch
      %71 = sbr.rel (0) target = $region33
    $region32: #{tpu_custom_call.1} parent=1 // pred_region
      _
    $region33: #{tpu_custom_call.1} parent=1 // pred_fallthru
      _
    // Predicated region
    $region34: #{tpu_custom_call.1} parent=1 // pred_check
      _
    $region35: #{tpu_custom_call.1} parent=1 // pred_check_branch
      %73 = sbr.rel (0) target = $region37
    $region36: #{tpu_custom_call.1} parent=1 // pred_region
      _
    $region37: #{tpu_custom_call.1} parent=1 // pred_fallthru
      _
    // Predicated region
    $region38: #{tpu_custom_call.1} parent=1 // pred_check
      _
    $region39: #{tpu_custom_call.1} parent=1 // pred_check_branch
      %75 = sbr.rel (0) target = $region41
    $region40: #{tpu_custom_call.1} parent=1 // pred_region
      %76 = dma.done [#allocation3], 1152
    $region41: #{tpu_custom_call.1} parent=1 // pred_fallthru
      _
    // Predicated region
    $region42: #{tpu_custom_call.1} parent=1 // pred_check
      _
    $region43: #{tpu_custom_call.1} parent=1 // pred_check_branch
      %78 = sbr.rel (0) target = $region45
    $region44: #{tpu_custom_call.1} parent=1 // pred_region
      %79 = dma.done [#allocation6], 17280
    $region45: #{tpu_custom_call.1} parent=1 // pred_fallthru
      _
    // Predicated region
    $region46: #{tpu_custom_call.1} parent=1 // pred_check
      _
    $region47: #{tpu_custom_call.1} parent=1 // pred_check_branch
      %81 = sbr.rel (0) target = $region49
    $region48: #{tpu_custom_call.1} parent=1 // pred_region
      %82 = dma.done [#allocation6], 2048
    $region49: #{tpu_custom_call.1} parent=1 // pred_fallthru
      _
    // Predicated region
    $region50: #{tpu_custom_call.1} parent=1 // pred_check
      _
    $region51: #{tpu_custom_call.1} parent=1 // pred_check_branch
      %84 = sbr.rel (0) target = $region53
    $region52: #{tpu_custom_call.1} parent=1 // pred_region
      %85 = dma.done [#allocation9], 1024
    $region53: #{tpu_custom_call.1} parent=1 // pred_fallthru
      _
    %v87 = vld [vmem:[#allocation2] sm:$0xff]
    %v88 = vld [vmem:[#allocation2 + $0x8] sm:$0xff]
    %v89 = vld [vmem:[#allocation2 + $0x10] sm:$0xff]
    %v90 = vld [vmem:[#allocation2 + $0x18] sm:$0xff]
    %v91 = vld [vmem:[#allocation2 + $0x20] sm:$0xff]
    %v92 = vld [vmem:[#allocation2 + $0x28] sm:$0xff]
    %v93 = vld [vmem:[#allocation2 + $0x30] sm:$0xff]
    %v94 = vld [vmem:[#allocation2 + $0x38] sm:$0xff]
    %v95 = vld [vmem:[#allocation2 + $0x40] sm:$0xff]
    %v96 = vpack.c.bf16 %v87, %v87
    %v97 = vpack.c.bf16 %v88, %v88
    %v98 = vpack.c.bf16 %v89, %v89
    %v99 = vpack.c.bf16 %v90, %v90
    %v100 = vpack.c.bf16 %v91, %v91
    %v101 = vpack.c.bf16 %v92, %v92
    %v102 = vpack.c.bf16 %v93, %v93
    %v103 = vpack.c.bf16 %v94, %v94
    %v104 = vpack.c.bf16 %v95, %v95
    %v105 = vld [vmem:[#allocation5] sm:$0xff]
    %v106 = vld [vmem:[#allocation5 + $0x8] sm:$0xff]
    %v107 = vld [vmem:[#allocation5 + $0x10] sm:$0xff]
    %v108 = vld [vmem:[#allocation5 + $0x18] sm:$0xff]
    %v109 = vld [vmem:[#allocation5 + $0x20] sm:$0xff]
    %v110 = vld [vmem:[#allocation5 + $0x28] sm:$0xff]
    %v111 = vld [vmem:[#allocation5 + $0x30] sm:$0xff]
    %v112 = vld [vmem:[#allocation5 + $0x38] sm:$0xff]
    %v113 = vld [vmem:[#allocation5 + $0x40] sm:$0xff]
    %v114 = vld [vmem:[#allocation5 + $0x48] sm:$0xff]
    %v115 = vld [vmem:[#allocation5 + $0x50] sm:$0xff]
    %v116 = vld [vmem:[#allocation5 + $0x58] sm:$0xff]
    %v117 = vld [vmem:[#allocation5 + $0x60] sm:$0xff]
    %v118 = vld [vmem:[#allocation5 + $0x68] sm:$0xff]
    %v119 = vld [vmem:[#allocation5 + $0x70] sm:$0xff]
    %v120 = vld [vmem:[#allocation5 + $0x78] sm:$0xff]
    %v121 = vld [vmem:[#allocation5 + $0x80] sm:$0xff]
    %v122 = vld [vmem:[#allocation5 + $0x88] sm:$0xff]
    %v123 = vld [vmem:[#allocation5 + $0x90] sm:$0xff]
    %v124 = vld [vmem:[#allocation5 + $0x98] sm:$0xff]
    %v125 = vld [vmem:[#allocation5 + $0xa0] sm:$0xff]
    %v126 = vld [vmem:[#allocation5 + $0xa8] sm:$0xff]
    %v127 = vld [vmem:[#allocation5 + $0xb0] sm:$0xff]
    %v128 = vld [vmem:[#allocation5 + $0xb8] sm:$0xff]
    %v129 = vld [vmem:[#allocation5 + $0xc0] sm:$0xff]
    %v130 = vld [vmem:[#allocation5 + $0xc8] sm:$0xff]
    %v131 = vld [vmem:[#allocation5 + $0xd0] sm:$0xff]
    %v132 = vld [vmem:[#allocation5 + $0xd8] sm:$0xff]
    %v133 = vld [vmem:[#allocation5 + $0xe0] sm:$0xff]
    %v134 = vld [vmem:[#allocation5 + $0xe8] sm:$0xff]
    %v135 = vld [vmem:[#allocation5 + $0xf0] sm:$0xff]
    %v136 = vld [vmem:[#allocation5 + $0xf8] sm:$0xff]
    %v137 = vld [vmem:[#allocation5 + $0x100] sm:$0xff]
    %v138 = vld [vmem:[#allocation5 + $0x108] sm:$0xff]
    %v139 = vld [vmem:[#allocation5 + $0x110] sm:$0xff]
    %v140 = vld [vmem:[#allocation5 + $0x118] sm:$0xff]
    %v141 = vld [vmem:[#allocation5 + $0x120] sm:$0xff]
    %v142 = vld [vmem:[#allocation5 + $0x128] sm:$0xff]
    %v143 = vld [vmem:[#allocation5 + $0x130] sm:$0xff]
    %v144 = vld [vmem:[#allocation5 + $0x138] sm:$0xff]
    %v145 = vld [vmem:[#allocation5 + $0x140] sm:$0xff]
    %v146 = vld [vmem:[#allocation5 + $0x148] sm:$0xff]
    %v147 = vld [vmem:[#allocation5 + $0x150] sm:$0xff]
    %v148 = vld [vmem:[#allocation5 + $0x158] sm:$0xff]
    %v149 = vld [vmem:[#allocation5 + $0x160] sm:$0xff]
    %v150 = vld [vmem:[#allocation5 + $0x168] sm:$0xff]
    %v151 = vld [vmem:[#allocation5 + $0x170] sm:$0xff]
    %v152 = vld [vmem:[#allocation5 + $0x178] sm:$0xff]
    %v153 = vld [vmem:[#allocation5 + $0x180] sm:$0xff]
    %v154 = vld [vmem:[#allocation5 + $0x188] sm:$0xff]
    %v155 = vld [vmem:[#allocation5 + $0x190] sm:$0xff]
    %v156 = vld [vmem:[#allocation5 + $0x198] sm:$0xff]
    %v157 = vld [vmem:[#allocation5 + $0x1a0] sm:$0xff]
    %v158 = vld [vmem:[#allocation5 + $0x1a8] sm:$0xff]
    %v159 = vld [vmem:[#allocation5 + $0x1b0] sm:$0xff]
    %v160 = vld [vmem:[#allocation5 + $0x1b8] sm:$0xff]
    %v161 = vld [vmem:[#allocation5 + $0x1c0] sm:$0xff]
    %v162 = vld [vmem:[#allocation5 + $0x1c8] sm:$0xff]
    %v163 = vld [vmem:[#allocation5 + $0x1d0] sm:$0xff]
    %v164 = vld [vmem:[#allocation5 + $0x1d8] sm:$0xff]
    %v165 = vld [vmem:[#allocation5 + $0x1e0] sm:$0xff]
    %v166 = vld [vmem:[#allocation5 + $0x1e8] sm:$0xff]
    %v167 = vld [vmem:[#allocation5 + $0x1f0] sm:$0xff]
    %v168 = vld [vmem:[#allocation5 + $0x1f8] sm:$0xff]
    %v169 = vld [vmem:[#allocation5 + $0x200] sm:$0xff]
    %v170 = vld [vmem:[#allocation5 + $0x208] sm:$0xff]
    %v171 = vld [vmem:[#allocation5 + $0x210] sm:$0xff]
    %v172 = vld [vmem:[#allocation5 + $0x218] sm:$0xff]
    %v173 = vld [vmem:[#allocation5 + $0x220] sm:$0xff]
    %v174 = vld [vmem:[#allocation5 + $0x228] sm:$0xff]
    %v175 = vld [vmem:[#allocation5 + $0x230] sm:$0xff]
    %v176 = vld [vmem:[#allocation5 + $0x238] sm:$0xff]
    %v177 = vld [vmem:[#allocation5 + $0x240] sm:$0xff]
    %v178 = vld [vmem:[#allocation5 + $0x248] sm:$0xff]
    %v179 = vld [vmem:[#allocation5 + $0x250] sm:$0xff]
    %v180 = vld [vmem:[#allocation5 + $0x258] sm:$0xff]
    %v181 = vld [vmem:[#allocation5 + $0x260] sm:$0xff]
    %v182 = vld [vmem:[#allocation5 + $0x268] sm:$0xff]
    %v183 = vld [vmem:[#allocation5 + $0x270] sm:$0xff]
    %v184 = vld [vmem:[#allocation5 + $0x278] sm:$0xff]
    %v185 = vld [vmem:[#allocation5 + $0x280] sm:$0xff]
    %v186 = vld [vmem:[#allocation5 + $0x288] sm:$0xff]
    %v187 = vld [vmem:[#allocation5 + $0x290] sm:$0xff]
    %v188 = vld [vmem:[#allocation5 + $0x298] sm:$0xff]
    %v189 = vld [vmem:[#allocation5 + $0x2a0] sm:$0xff]
    %v190 = vld [vmem:[#allocation5 + $0x2a8] sm:$0xff]
    %v191 = vld [vmem:[#allocation5 + $0x2b0] sm:$0xff]
    %v192 = vld [vmem:[#allocation5 + $0x2b8] sm:$0xff]
    %v193 = vld [vmem:[#allocation5 + $0x2c0] sm:$0xff]
    %v194 = vld [vmem:[#allocation5 + $0x2c8] sm:$0xff]
    %v195 = vld [vmem:[#allocation5 + $0x2d0] sm:$0xff]
    %v196 = vld [vmem:[#allocation5 + $0x2d8] sm:$0xff]
    %v197 = vld [vmem:[#allocation5 + $0x2e0] sm:$0xff]
    %v198 = vld [vmem:[#allocation5 + $0x2e8] sm:$0xff]
    %v199 = vld [vmem:[#allocation5 + $0x2f0] sm:$0xff]
    %v200 = vld [vmem:[#allocation5 + $0x2f8] sm:$0xff]
    %v201 = vld [vmem:[#allocation5 + $0x300] sm:$0xff]
    %v202 = vld [vmem:[#allocation5 + $0x308] sm:$0xff]
    %v203 = vld [vmem:[#allocation5 + $0x310] sm:$0xff]
    %v204 = vld [vmem:[#allocation5 + $0x318] sm:$0xff]
    %v205 = vld [vmem:[#allocation5 + $0x320] sm:$0xff]
    %v206 = vld [vmem:[#allocation5 + $0x328] sm:$0xff]
    %v207 = vld [vmem:[#allocation5 + $0x330] sm:$0xff]
    %v208 = vld [vmem:[#allocation5 + $0x338] sm:$0xff]
    %v209 = vld [vmem:[#allocation5 + $0x340] sm:$0xff]
    %v210 = vld [vmem:[#allocation5 + $0x348] sm:$0xff]
    %v211 = vld [vmem:[#allocation5 + $0x350] sm:$0xff]
    %v212 = vld [vmem:[#allocation5 + $0x358] sm:$0xff]
    %v213 = vld [vmem:[#allocation5 + $0x360] sm:$0xff]
    %v214 = vld [vmem:[#allocation5 + $0x368] sm:$0xff]
    %v215 = vld [vmem:[#allocation5 + $0x370] sm:$0xff]
    %v216 = vld [vmem:[#allocation5 + $0x378] sm:$0xff]
    %v217 = vld [vmem:[#allocation5 + $0x380] sm:$0xff]
    %v218 = vld [vmem:[#allocation5 + $0x388] sm:$0xff]
    %v219 = vld [vmem:[#allocation5 + $0x390] sm:$0xff]
    %v220 = vld [vmem:[#allocation5 + $0x398] sm:$0xff]
    %v221 = vld [vmem:[#allocation5 + $0x3a0] sm:$0xff]
    %v222 = vld [vmem:[#allocation5 + $0x3a8] sm:$0xff]
    %v223 = vld [vmem:[#allocation5 + $0x3b0] sm:$0xff]
    %v224 = vld [vmem:[#allocation5 + $0x3b8] sm:$0xff]
    %v225 = vld [vmem:[#allocation5 + $0x3c0] sm:$0xff]
    %v226 = vld [vmem:[#allocation5 + $0x3c8] sm:$0xff]
    %v227 = vld [vmem:[#allocation5 + $0x3d0] sm:$0xff]
    %v228 = vld [vmem:[#allocation5 + $0x3d8] sm:$0xff]
    %v229 = vld [vmem:[#allocation5 + $0x3e0] sm:$0xff]
    %v230 = vld [vmem:[#allocation5 + $0x3e8] sm:$0xff]
    %v231 = vld [vmem:[#allocation5 + $0x3f0] sm:$0xff]
    %v232 = vld [vmem:[#allocation5 + $0x3f8] sm:$0xff]
    %v233 = vld [vmem:[#allocation5 + $0x400] sm:$0xff]
    %v234 = vld [vmem:[#allocation5 + $0x408] sm:$0xff]
    %v235 = vld [vmem:[#allocation5 + $0x410] sm:$0xff]
    %v236 = vld [vmem:[#allocation5 + $0x418] sm:$0xff]
    %v237 = vld [vmem:[#allocation5 + $0x420] sm:$0xff]
    %v238 = vld [vmem:[#allocation5 + $0x428] sm:$0xff]
    %v239 = vld [vmem:[#allocation5 + $0x430] sm:$0xff]
    %v240 = vld [vmem:[%s2] sm:$0x3]
    %v242 = vlaneseq
    %v243 = vshrl.u32 %v242, 7
    %v244 = vsub.s32 0, %v243
    %v245 = vrot.slane %v240, %v244
    %v246 = vlaneseq
    %v247 = vshrl.u32 %v246, 7
    %v248 = vsub.s32 1, %v247
    %v249 = vrot.slane %v240, %v248
    %v387 = vunpack.c.l.b16 %v105
    %v388 = vunpack.c.h.b16 %v105
    %v389 = vunpack.c.l.b16 %v106
    %v390 = vunpack.c.h.b16 %v106
    %v391 = vunpack.c.l.b16 %v107
    %v392 = vunpack.c.h.b16 %v107
    %v393 = vunpack.c.l.b16 %v108
    %v394 = vunpack.c.h.b16 %v108
    %v395 = vunpack.c.l.b16 %v109
    %v396 = vunpack.c.h.b16 %v109
    %v397 = vunpack.c.l.b16 %v110
    %v398 = vunpack.c.h.b16 %v110
    %v399 = vunpack.c.l.b16 %v111
    %v400 = vunpack.c.h.b16 %v111
    %v401 = vunpack.c.l.b16 %v112
    %v402 = vunpack.c.h.b16 %v112
    %v403 = vunpack.c.l.b16 %v113
    %v404 = vunpack.c.h.b16 %v113
    %v405 = vunpack.c.l.b16 %v114
    %v406 = vunpack.c.h.b16 %v114
    %v407 = vunpack.c.l.b16 %v115
    %v408 = vunpack.c.h.b16 %v115
    %v409 = vunpack.c.l.b16 %v116
    %v410 = vunpack.c.h.b16 %v116
    %v411 = vunpack.c.l.b16 %v117
    %v412 = vunpack.c.h.b16 %v117
    %v413 = vunpack.c.l.b16 %v118
    %v414 = vunpack.c.h.b16 %v118
    %v415 = vunpack.c.l.b16 %v119
    %v416 = vunpack.c.h.b16 %v119
    %v417 = vunpack.c.l.b16 %v120
    %v418 = vunpack.c.h.b16 %v120
    %v419 = vunpack.c.l.b16 %v121
    %v420 = vunpack.c.h.b16 %v121
    %v421 = vunpack.c.l.b16 %v122
    %v422 = vunpack.c.h.b16 %v122
    %v423 = vunpack.c.l.b16 %v123
    %v424 = vunpack.c.h.b16 %v123
    %v425 = vunpack.c.l.b16 %v124
    %v426 = vunpack.c.h.b16 %v124
    %v427 = vunpack.c.l.b16 %v125
    %v428 = vunpack.c.h.b16 %v125
    %v429 = vunpack.c.l.b16 %v126
    %v430 = vunpack.c.h.b16 %v126
    %v431 = vunpack.c.l.b16 %v127
    %v432 = vunpack.c.h.b16 %v127
    %v433 = vunpack.c.l.b16 %v128
    %v434 = vunpack.c.h.b16 %v128
    %v435 = vunpack.c.l.b16 %v129
    %v436 = vunpack.c.h.b16 %v129
    %v437 = vunpack.c.l.b16 %v130
    %v438 = vunpack.c.h.b16 %v130
    %v439 = vunpack.c.l.b16 %v131
    %v440 = vunpack.c.h.b16 %v131
    %v441 = vunpack.c.l.b16 %v132
    %v442 = vunpack.c.h.b16 %v132
    %v443 = vunpack.c.l.b16 %v133
    %v444 = vunpack.c.h.b16 %v133
    %v445 = vunpack.c.l.b16 %v134
    %v446 = vunpack.c.h.b16 %v134
    %v447 = vunpack.c.l.b16 %v135
    %v448 = vunpack.c.h.b16 %v135
    %v449 = vunpack.c.l.b16 %v136
    %v450 = vunpack.c.h.b16 %v136
    %v451 = vunpack.c.l.b16 %v137
    %v452 = vunpack.c.h.b16 %v137
    %v453 = vunpack.c.l.b16 %v138
    %v454 = vunpack.c.h.b16 %v138
    %v455 = vunpack.c.l.b16 %v139
    %v456 = vunpack.c.h.b16 %v139
    %v457 = vunpack.c.l.b16 %v140
    %v458 = vunpack.c.h.b16 %v140
    %v459 = vunpack.c.l.b16 %v141
    %v460 = vunpack.c.h.b16 %v141
    %v461 = vunpack.c.l.b16 %v142
    %v462 = vunpack.c.h.b16 %v142
    %v463 = vunpack.c.l.b16 %v143
    %v464 = vunpack.c.h.b16 %v143
    %v465 = vunpack.c.l.b16 %v144
    %v466 = vunpack.c.h.b16 %v144
    %v467 = vunpack.c.l.b16 %v145
    %v468 = vunpack.c.h.b16 %v145
    %v469 = vunpack.c.l.b16 %v146
    %v470 = vunpack.c.h.b16 %v146
    %v471 = vunpack.c.l.b16 %v147
    %v472 = vunpack.c.h.b16 %v147
    %v473 = vunpack.c.l.b16 %v148
    %v474 = vunpack.c.h.b16 %v148
    %v475 = vunpack.c.l.b16 %v149
    %v476 = vunpack.c.h.b16 %v149
    %v477 = vunpack.c.l.b16 %v150
    %v478 = vunpack.c.h.b16 %v150
    %v479 = vunpack.c.l.b16 %v151
    %v480 = vunpack.c.h.b16 %v151
    %v481 = vunpack.c.l.b16 %v152
    %v482 = vunpack.c.h.b16 %v152
    %v483 = vunpack.c.l.b16 %v153
    %v484 = vunpack.c.h.b16 %v153
    %v485 = vunpack.c.l.b16 %v154
    %v486 = vunpack.c.h.b16 %v154
    %v487 = vunpack.c.l.b16 %v155
    %v488 = vunpack.c.h.b16 %v155
    %v489 = vunpack.c.l.b16 %v156
    %v490 = vunpack.c.h.b16 %v156
    %v491 = vunpack.c.l.b16 %v157
    %v492 = vunpack.c.h.b16 %v157
    %v493 = vunpack.c.l.b16 %v158
    %v494 = vunpack.c.h.b16 %v158
    %v495 = vunpack.c.l.b16 %v159
    %v496 = vunpack.c.h.b16 %v159
    %v497 = vunpack.c.l.b16 %v160
    %v498 = vunpack.c.h.b16 %v160
    %v499 = vunpack.c.l.b16 %v161
    %v500 = vunpack.c.h.b16 %v161
    %v501 = vunpack.c.l.b16 %v162
    %v502 = vunpack.c.h.b16 %v162
    %v503 = vunpack.c.l.b16 %v163
    %v504 = vunpack.c.h.b16 %v163
    %v505 = vunpack.c.l.b16 %v164
    %v506 = vunpack.c.h.b16 %v164
    %v507 = vunpack.c.l.b16 %v165
    %v508 = vunpack.c.h.b16 %v165
    %v509 = vunpack.c.l.b16 %v166
    %v510 = vunpack.c.h.b16 %v166
    %v511 = vunpack.c.l.b16 %v167
    %v512 = vunpack.c.h.b16 %v167
    %v513 = vunpack.c.l.b16 %v168
    %v514 = vunpack.c.h.b16 %v168
    %v515 = vunpack.c.l.b16 %v169
    %v516 = vunpack.c.h.b16 %v169
    %v517 = vunpack.c.l.b16 %v170
    %v518 = vunpack.c.h.b16 %v170
    %v519 = vunpack.c.l.b16 %v171
    %v520 = vunpack.c.h.b16 %v171
    %v521 = vunpack.c.l.b16 %v172
    %v522 = vunpack.c.h.b16 %v172
    %v523 = vunpack.c.l.b16 %v173
    %v524 = vunpack.c.h.b16 %v173
    %v525 = vunpack.c.l.b16 %v174
    %v526 = vunpack.c.h.b16 %v174
    %v527 = vunpack.c.l.b16 %v175
    %v528 = vunpack.c.h.b16 %v175
    %v529 = vunpack.c.l.b16 %v176
    %v530 = vunpack.c.h.b16 %v176
    %v531 = vunpack.c.l.b16 %v177
    %v532 = vunpack.c.h.b16 %v177
    %v533 = vunpack.c.l.b16 %v178
    %v534 = vunpack.c.h.b16 %v178
    %v535 = vunpack.c.l.b16 %v179
    %v536 = vunpack.c.h.b16 %v179
    %v537 = vunpack.c.l.b16 %v180
    %v538 = vunpack.c.h.b16 %v180
    %v539 = vunpack.c.l.b16 %v181
    %v540 = vunpack.c.h.b16 %v181
    %v541 = vunpack.c.l.b16 %v182
    %v542 = vunpack.c.h.b16 %v182
    %v543 = vunpack.c.l.b16 %v183
    %v544 = vunpack.c.h.b16 %v183
    %v545 = vunpack.c.l.b16 %v184
    %v546 = vunpack.c.h.b16 %v184
    %v547 = vunpack.c.l.b16 %v185
    %v548 = vunpack.c.h.b16 %v185
    %v549 = vunpack.c.l.b16 %v186
    %v550 = vunpack.c.h.b16 %v186
    %v551 = vunpack.c.l.b16 %v187
    %v552 = vunpack.c.h.b16 %v187
    %v553 = vunpack.c.l.b16 %v188
    %v554 = vunpack.c.h.b16 %v188
    %v555 = vunpack.c.l.b16 %v189
    %v556 = vunpack.c.h.b16 %v189
    %v557 = vunpack.c.l.b16 %v190
    %v558 = vunpack.c.h.b16 %v190
    %v559 = vunpack.c.l.b16 %v191
    %v560 = vunpack.c.h.b16 %v191
    %v561 = vunpack.c.l.b16 %v192
    %v562 = vunpack.c.h.b16 %v192
    %v563 = vunpack.c.l.b16 %v193
    %v564 = vunpack.c.h.b16 %v193
    %v565 = vunpack.c.l.b16 %v194
    %v566 = vunpack.c.h.b16 %v194
    %v567 = vunpack.c.l.b16 %v195
    %v568 = vunpack.c.h.b16 %v195
    %v569 = vunpack.c.l.b16 %v196
    %v570 = vunpack.c.h.b16 %v196
    %v571 = vunpack.c.l.b16 %v197
    %v572 = vunpack.c.h.b16 %v197
    %v573 = vunpack.c.l.b16 %v198
    %v574 = vunpack.c.h.b16 %v198
    %v575 = vunpack.c.l.b16 %v199
    %v576 = vunpack.c.h.b16 %v199
    %v577 = vunpack.c.l.b16 %v200
    %v578 = vunpack.c.h.b16 %v200
    %v579 = vunpack.c.l.b16 %v201
    %v580 = vunpack.c.h.b16 %v201
    %v581 = vunpack.c.l.b16 %v202
    %v582 = vunpack.c.h.b16 %v202
    %v583 = vunpack.c.l.b16 %v203
    %v584 = vunpack.c.h.b16 %v203
    %v585 = vunpack.c.l.b16 %v204
    %v586 = vunpack.c.h.b16 %v204
    %v587 = vunpack.c.l.b16 %v205
    %v588 = vunpack.c.h.b16 %v205
    %v589 = vunpack.c.l.b16 %v206
    %v590 = vunpack.c.h.b16 %v206
    %v591 = vunpack.c.l.b16 %v207
    %v592 = vunpack.c.h.b16 %v207
    %v593 = vunpack.c.l.b16 %v208
    %v594 = vunpack.c.h.b16 %v208
    %v595 = vunpack.c.l.b16 %v209
    %v596 = vunpack.c.h.b16 %v209
    %v597 = vunpack.c.l.b16 %v210
    %v598 = vunpack.c.h.b16 %v210
    %v599 = vunpack.c.l.b16 %v211
    %v600 = vunpack.c.h.b16 %v211
    %v601 = vunpack.c.l.b16 %v212
    %v602 = vunpack.c.h.b16 %v212
    %v603 = vunpack.c.l.b16 %v213
    %v604 = vunpack.c.h.b16 %v213
    %v605 = vunpack.c.l.b16 %v214
    %v606 = vunpack.c.h.b16 %v214
    %v607 = vunpack.c.l.b16 %v215
    %v608 = vunpack.c.h.b16 %v215
    %v609 = vunpack.c.l.b16 %v216
    %v610 = vunpack.c.h.b16 %v216
    %v611 = vunpack.c.l.b16 %v217
    %v612 = vunpack.c.h.b16 %v217
    %v613 = vunpack.c.l.b16 %v218
    %v614 = vunpack.c.h.b16 %v218
    %v615 = vunpack.c.l.b16 %v219
    %v616 = vunpack.c.h.b16 %v219
    %v617 = vunpack.c.l.b16 %v220
    %v618 = vunpack.c.h.b16 %v220
    %v619 = vunpack.c.l.b16 %v221
    %v620 = vunpack.c.h.b16 %v221
    %v621 = vunpack.c.l.b16 %v222
    %v622 = vunpack.c.h.b16 %v222
    %v623 = vunpack.c.l.b16 %v223
    %v624 = vunpack.c.h.b16 %v223
    %v625 = vunpack.c.l.b16 %v224
    %v626 = vunpack.c.h.b16 %v224
    %v627 = vunpack.c.l.b16 %v225
    %v628 = vunpack.c.h.b16 %v225
    %v629 = vunpack.c.l.b16 %v226
    %v630 = vunpack.c.h.b16 %v226
    %v631 = vunpack.c.l.b16 %v227
    %v632 = vunpack.c.h.b16 %v227
    %v633 = vunpack.c.l.b16 %v228
    %v634 = vunpack.c.h.b16 %v228
    %v635 = vunpack.c.l.b16 %v229
    %v636 = vunpack.c.h.b16 %v229
    %v637 = vunpack.c.l.b16 %v230
    %v638 = vunpack.c.h.b16 %v230
    %v639 = vunpack.c.l.b16 %v231
    %v640 = vunpack.c.h.b16 %v231
    %v641 = vunpack.c.l.b16 %v232
    %v642 = vunpack.c.h.b16 %v232
    %v643 = vunpack.c.l.b16 %v233
    %v644 = vunpack.c.h.b16 %v233
    %v645 = vunpack.c.l.b16 %v234
    %v646 = vunpack.c.h.b16 %v234
    %v647 = vunpack.c.l.b16 %v235
    %v648 = vunpack.c.h.b16 %v235
    %v649 = vunpack.c.l.b16 %v236
    %v650 = vunpack.c.h.b16 %v236
    %v651 = vunpack.c.l.b16 %v237
    %v652 = vunpack.c.h.b16 %v237
    %v653 = vunpack.c.l.b16 %v238
    %v654 = vunpack.c.h.b16 %v238
    %v655 = vunpack.c.l.b16 %v239
    %v656 = vunpack.c.h.b16 %v239
    %v657 = vpack.c.b16 %v389, %v387
    %v658 = vpack.c.b16 %v390, %v388
    %v659 = vpack.c.b16 %v393, %v391
    %v660 = vpack.c.b16 %v394, %v392
    %v661 = vpack.c.b16 %v397, %v395
    %v662 = vpack.c.b16 %v398, %v396
    %v663 = vpack.c.b16 %v401, %v399
    %v664 = vpack.c.b16 %v402, %v400
    %v665 = vpack.c.b16 %v405, %v403
    %v666 = vpack.c.b16 %v406, %v404
    %v667 = vpack.c.b16 %v409, %v407
    %v668 = vpack.c.b16 %v410, %v408
    %v669 = vpack.c.b16 %v413, %v411
    %v670 = vpack.c.b16 %v414, %v412
    %v671 = vpack.c.b16 %v417, %v415
    %v672 = vpack.c.b16 %v418, %v416
    %v673 = vpack.c.b16 %v421, %v419
    %v674 = vpack.c.b16 %v422, %v420
    %v675 = vpack.c.b16 %v425, %v423
    %v676 = vpack.c.b16 %v426, %v424
    %v677 = vpack.c.b16 %v429, %v427
    %v678 = vpack.c.b16 %v430, %v428
    %v679 = vpack.c.b16 %v433, %v431
    %v680 = vpack.c.b16 %v434, %v432
    %v681 = vpack.c.b16 %v437, %v435
    %v682 = vpack.c.b16 %v438, %v436
    %v683 = vpack.c.b16 %v441, %v439
    %v684 = vpack.c.b16 %v442, %v440
    %v685 = vpack.c.b16 %v445, %v443
    %v686 = vpack.c.b16 %v446, %v444
    %v687 = vpack.c.b16 %v449, %v447
    %v688 = vpack.c.b16 %v450, %v448
    %v689 = vpack.c.b16 %v453, %v451
    %v690 = vpack.c.b16 %v454, %v452
    %v691 = vpack.c.b16 %v457, %v455
    %v692 = vpack.c.b16 %v458, %v456
    %v693 = vpack.c.b16 %v461, %v459
    %v694 = vpack.c.b16 %v462, %v460
    %v695 = vpack.c.b16 %v465, %v463
    %v696 = vpack.c.b16 %v466, %v464
    %v697 = vpack.c.b16 %v469, %v467
    %v698 = vpack.c.b16 %v470, %v468
    %v699 = vpack.c.b16 %v473, %v471
    %v700 = vpack.c.b16 %v474, %v472
    %v701 = vpack.c.b16 %v477, %v475
    %v702 = vpack.c.b16 %v478, %v476
    %v703 = vpack.c.b16 %v481, %v479
    %v704 = vpack.c.b16 %v482, %v480
    %v705 = vpack.c.b16 %v485, %v483
    %v706 = vpack.c.b16 %v486, %v484
    %v707 = vpack.c.b16 %v489, %v487
    %v708 = vpack.c.b16 %v490, %v488
    %v709 = vpack.c.b16 %v493, %v491
    %v710 = vpack.c.b16 %v494, %v492
    %v711 = vpack.c.b16 %v497, %v495
    %v712 = vpack.c.b16 %v498, %v496
    %v713 = vpack.c.b16 %v501, %v499
    %v714 = vpack.c.b16 %v502, %v500
    %v715 = vpack.c.b16 %v505, %v503
    %v716 = vpack.c.b16 %v506, %v504
    %v717 = vpack.c.b16 %v509, %v507
    %v718 = vpack.c.b16 %v510, %v508
    %v719 = vpack.c.b16 %v513, %v511
    %v720 = vpack.c.b16 %v514, %v512
    %v721 = vpack.c.b16 %v517, %v515
    %v722 = vpack.c.b16 %v518, %v516
    %v723 = vpack.c.b16 %v521, %v519
    %v724 = vpack.c.b16 %v522, %v520
    %v725 = vpack.c.b16 %v525, %v523
    %v726 = vpack.c.b16 %v526, %v524
    %v727 = vpack.c.b16 %v529, %v527
    %v728 = vpack.c.b16 %v530, %v528
    %v729 = vpack.c.b16 %v533, %v531
    %v730 = vpack.c.b16 %v534, %v532
    %v731 = vpack.c.b16 %v537, %v535
    %v732 = vpack.c.b16 %v538, %v536
    %v733 = vpack.c.b16 %v541, %v539
    %v734 = vpack.c.b16 %v542, %v540
    %v735 = vpack.c.b16 %v545, %v543
    %v736 = vpack.c.b16 %v546, %v544
    %v737 = vpack.c.b16 %v549, %v547
    %v738 = vpack.c.b16 %v550, %v548
    %v739 = vpack.c.b16 %v553, %v551
    %v740 = vpack.c.b16 %v554, %v552
    %v741 = vpack.c.b16 %v557, %v555
    %v742 = vpack.c.b16 %v558, %v556
    %v743 = vpack.c.b16 %v561, %v559
    %v744 = vpack.c.b16 %v562, %v560
    %v745 = vpack.c.b16 %v565, %v563
    %v746 = vpack.c.b16 %v566, %v564
    %v747 = vpack.c.b16 %v569, %v567
    %v748 = vpack.c.b16 %v570, %v568
    %v749 = vpack.c.b16 %v573, %v571
    %v750 = vpack.c.b16 %v574, %v572
    %v751 = vpack.c.b16 %v577, %v575
    %v752 = vpack.c.b16 %v578, %v576
    %v753 = vpack.c.b16 %v581, %v579
    %v754 = vpack.c.b16 %v582, %v580
    %v755 = vpack.c.b16 %v585, %v583
    %v756 = vpack.c.b16 %v586, %v584
    %v757 = vpack.c.b16 %v589, %v587
    %v758 = vpack.c.b16 %v590, %v588
    %v759 = vpack.c.b16 %v593, %v591
    %v760 = vpack.c.b16 %v594, %v592
    %v761 = vpack.c.b16 %v597, %v595
    %v762 = vpack.c.b16 %v598, %v596
    %v763 = vpack.c.b16 %v601, %v599
    %v764 = vpack.c.b16 %v602, %v600
    %v765 = vpack.c.b16 %v605, %v603
    %v766 = vpack.c.b16 %v606, %v604
    %v767 = vpack.c.b16 %v609, %v607
    %v768 = vpack.c.b16 %v610, %v608
    %v769 = vpack.c.b16 %v613, %v611
    %v770 = vpack.c.b16 %v614, %v612
    %v771 = vpack.c.b16 %v617, %v615
    %v772 = vpack.c.b16 %v618, %v616
    %v773 = vpack.c.b16 %v621, %v619
    %v774 = vpack.c.b16 %v622, %v620
    %v775 = vpack.c.b16 %v625, %v623
    %v776 = vpack.c.b16 %v626, %v624
    %v777 = vpack.c.b16 %v629, %v627
    %v778 = vpack.c.b16 %v630, %v628
    %v779 = vpack.c.b16 %v633, %v631
    %v780 = vpack.c.b16 %v634, %v632
    %v781 = vpack.c.b16 %v637, %v635
    %v782 = vpack.c.b16 %v638, %v636
    %v783 = vpack.c.b16 %v641, %v639
    %v784 = vpack.c.b16 %v642, %v640
    %v785 = vpack.c.b16 %v645, %v643
    %v786 = vpack.c.b16 %v646, %v644
    %v787 = vpack.c.b16 %v649, %v647
    %v788 = vpack.c.b16 %v650, %v648
    %v789 = vpack.c.b16 %v653, %v651
    %v790 = vpack.c.b16 %v654, %v652
    %v791 = vpack.c.b16 %v655, %v655
    %v792 = vpack.c.b16 %v656, %v656
    %vm927 = vcmask 457728
    %v929 = vsel %vm927, %v104, 0
    %vm931 = vcmask 1043456
    %v933 = vsel %vm931, %v791, 0
    %v936 = vsel %vm931, %v792, 0
    %938 = vmatprep.subr.bf16.mxu0 %v658
    %939 = vmatpush1.bf16.msra.mxu0 %v657
    %940 = vmatprep.subr.bf16.mxu0 %v660
    %941 = vmatpush1.bf16.msra.mxu0 %v659
    %942 = vmatprep.subr.bf16.mxu0 %v662
    %943 = vmatpush1.bf16.msra.mxu0 %v661
    %944 = vmatprep.subr.bf16.mxu0 %v664
    %945 = vmatpush1.bf16.msra.mxu0 %v663
    %946 = vmatprep.subr.bf16.mxu0 %v666
    %947 = vmatpush1.bf16.msra.mxu0 %v665
    %948 = vmatprep.subr.bf16.mxu0 %v668
    %949 = vmatpush1.bf16.msra.mxu0 %v667
    %950 = vmatprep.subr.bf16.mxu0 %v670
    %951 = vmatpush1.bf16.msra.mxu0 %v669
    %952 = vmatprep.subr.bf16.mxu0 %v672
    %953 = vmatpush1.bf16.msra.mxu0 %v671
    %954 = vmatprep.subr.bf16.mxu0 %v674
    %955 = vmatpush1.bf16.msra.mxu0 %v673
    %956 = vmatprep.subr.bf16.mxu0 %v676
    %957 = vmatpush1.bf16.msra.mxu0 %v675
    %958 = vmatprep.subr.bf16.mxu0 %v678
    %959 = vmatpush1.bf16.msra.mxu0 %v677
    %960 = vmatprep.subr.bf16.mxu0 %v680
    %961 = vmatpush1.bf16.msra.mxu0 %v679
    %962 = vmatprep.subr.bf16.mxu0 %v682
    %963 = vmatpush1.bf16.msra.mxu0 %v681
    %964 = vmatprep.subr.bf16.mxu0 %v684
    %965 = vmatpush1.bf16.msra.mxu0 %v683
    %966 = vmatprep.subr.bf16.mxu0 %v686
    %967 = vmatpush1.bf16.msra.mxu0 %v685
    %968 = vmatprep.subr.bf16.mxu0 %v688
    %969 = vmatpush1.bf16.msra.mxu0 %v687
    %970 = vmatprep.mubr.bf16.mxu0 %v97
    %971 = vmatmul.mubr.bf16.gmra.mrb[0].mxu0 %v96
    %v972 = vpop.f32.mrb[0].mxu0
    %v973 = vadd.f32 %v245, %v972
    %v974 = vpop.f32.mrb[0].mxu0
    %v975 = vadd.f32 %v249, %v974
    %v976 = vpop.f32.mrb[0].mxu0
    %v977 = vpop.f32.mrb[0].mxu0
    %978 = vdwg.mxu0
    %979 = vmatprep.subr.bf16.mxu0 %v690
    %980 = vmatpush1.bf16.msra.mxu0 %v689
    %981 = vmatprep.subr.bf16.mxu0 %v692
    %982 = vmatpush1.bf16.msra.mxu0 %v691
    %983 = vmatprep.subr.bf16.mxu0 %v694
    %984 = vmatpush1.bf16.msra.mxu0 %v693
    %985 = vmatprep.subr.bf16.mxu0 %v696
    %986 = vmatpush1.bf16.msra.mxu0 %v695
    %987 = vmatprep.subr.bf16.mxu0 %v698
    %988 = vmatpush1.bf16.msra.mxu0 %v697
    %989 = vmatprep.subr.bf16.mxu0 %v700
    %990 = vmatpush1.bf16.msra.mxu0 %v699
    %991 = vmatprep.subr.bf16.mxu0 %v702
    %992 = vmatpush1.bf16.msra.mxu0 %v701
    %993 = vmatprep.subr.bf16.mxu0 %v704
    %994 = vmatpush1.bf16.msra.mxu0 %v703
    %995 = vmatprep.subr.bf16.mxu0 %v706
    %996 = vmatpush1.bf16.msra.mxu0 %v705
    %997 = vmatprep.subr.bf16.mxu0 %v708
    %998 = vmatpush1.bf16.msra.mxu0 %v707
    %999 = vmatprep.subr.bf16.mxu0 %v710
    %1000 = vmatpush1.bf16.msra.mxu0 %v709
    %1001 = vmatprep.subr.bf16.mxu0 %v712
    %1002 = vmatpush1.bf16.msra.mxu0 %v711
    %1003 = vmatprep.subr.bf16.mxu0 %v714
    %1004 = vmatpush1.bf16.msra.mxu0 %v713
    %1005 = vmatprep.subr.bf16.mxu0 %v716
    %1006 = vmatpush1.bf16.msra.mxu0 %v715
    %1007 = vmatprep.subr.bf16.mxu0 %v718
    %1008 = vmatpush1.bf16.msra.mxu0 %v717
    %1009 = vmatprep.subr.bf16.mxu0 %v720
    %1010 = vmatpush1.bf16.msra.mxu0 %v719
    %1011 = vmatprep.mubr.bf16.mxu0 %v99
    %1012 = vmatmul.mubr.bf16.gmra.mrb[0].mxu0 %v98
    %v1013 = vpop.f32.mrb[0].mxu0
    %v1014 = vadd.f32 %v973, %v1013
    %v1015 = vpop.f32.mrb[0].mxu0
    %v1016 = vadd.f32 %v975, %v1015
    %v1017 = vpop.f32.mrb[0].mxu0
    %v1018 = vpop.f32.mrb[0].mxu0
    %1019 = vdwg.mxu0
    %1020 = vmatprep.subr.bf16.mxu0 %v722
    %1021 = vmatpush1.bf16.msra.mxu0 %v721
    %1022 = vmatprep.subr.bf16.mxu0 %v724
    %1023 = vmatpush1.bf16.msra.mxu0 %v723
    %1024 = vmatprep.subr.bf16.mxu0 %v726
    %1025 = vmatpush1.bf16.msra.mxu0 %v725
    %1026 = vmatprep.subr.bf16.mxu0 %v728
    %1027 = vmatpush1.bf16.msra.mxu0 %v727
    %1028 = vmatprep.subr.bf16.mxu0 %v730
    %1029 = vmatpush1.bf16.msra.mxu0 %v729
    %1030 = vmatprep.subr.bf16.mxu0 %v732
    %1031 = vmatpush1.bf16.msra.mxu0 %v731
    %1032 = vmatprep.subr.bf16.mxu0 %v734
    %1033 = vmatpush1.bf16.msra.mxu0 %v733
    %1034 = vmatprep.subr.bf16.mxu0 %v736
    %1035 = vmatpush1.bf16.msra.mxu0 %v735
    %1036 = vmatprep.subr.bf16.mxu0 %v738
    %1037 = vmatpush1.bf16.msra.mxu0 %v737
    %1038 = vmatprep.subr.bf16.mxu0 %v740
    %1039 = vmatpush1.bf16.msra.mxu0 %v739
    %1040 = vmatprep.subr.bf16.mxu0 %v742
    %1041 = vmatpush1.bf16.msra.mxu0 %v741
    %1042 = vmatprep.subr.bf16.mxu0 %v744
    %1043 = vmatpush1.bf16.msra.mxu0 %v743
    %1044 = vmatprep.subr.bf16.mxu0 %v746
    %1045 = vmatpush1.bf16.msra.mxu0 %v745
    %1046 = vmatprep.subr.bf16.mxu0 %v748
    %1047 = vmatpush1.bf16.msra.mxu0 %v747
    %1048 = vmatprep.subr.bf16.mxu0 %v750
    %1049 = vmatpush1.bf16.msra.mxu0 %v749
    %1050 = vmatprep.subr.bf16.mxu0 %v752
    %1051 = vmatpush1.bf16.msra.mxu0 %v751
    %1052 = vmatprep.mubr.bf16.mxu0 %v101
    %1053 = vmatmul.mubr.bf16.gmra.mrb[0].mxu0 %v100
    %v1054 = vpop.f32.mrb[0].mxu0
    %v1055 = vadd.f32 %v1014, %v1054
    %v1056 = vpop.f32.mrb[0].mxu0
    %v1057 = vadd.f32 %v1016, %v1056
    %v1058 = vpop.f32.mrb[0].mxu0
    %v1059 = vpop.f32.mrb[0].mxu0
    %1060 = vdwg.mxu0
    %1061 = vmatprep.subr.bf16.mxu0 %v754
    %1062 = vmatpush1.bf16.msra.mxu0 %v753
    %1063 = vmatprep.subr.bf16.mxu0 %v756
    %1064 = vmatpush1.bf16.msra.mxu0 %v755
    %1065 = vmatprep.subr.bf16.mxu0 %v758
    %1066 = vmatpush1.bf16.msra.mxu0 %v757
    %1067 = vmatprep.subr.bf16.mxu0 %v760
    %1068 = vmatpush1.bf16.msra.mxu0 %v759
    %1069 = vmatprep.subr.bf16.mxu0 %v762
    %1070 = vmatpush1.bf16.msra.mxu0 %v761
    %1071 = vmatprep.subr.bf16.mxu0 %v764
    %1072 = vmatpush1.bf16.msra.mxu0 %v763
    %1073 = vmatprep.subr.bf16.mxu0 %v766
    %1074 = vmatpush1.bf16.msra.mxu0 %v765
    %1075 = vmatprep.subr.bf16.mxu0 %v768
    %1076 = vmatpush1.bf16.msra.mxu0 %v767
    %1077 = vmatprep.subr.bf16.mxu0 %v770
    %1078 = vmatpush1.bf16.msra.mxu0 %v769
    %1079 = vmatprep.subr.bf16.mxu0 %v772
    %1080 = vmatpush1.bf16.msra.mxu0 %v771
    %1081 = vmatprep.subr.bf16.mxu0 %v774
    %1082 = vmatpush1.bf16.msra.mxu0 %v773
    %1083 = vmatprep.subr.bf16.mxu0 %v776
    %1084 = vmatpush1.bf16.msra.mxu0 %v775
    %1085 = vmatprep.subr.bf16.mxu0 %v778
    %1086 = vmatpush1.bf16.msra.mxu0 %v777
    %1087 = vmatprep.subr.bf16.mxu0 %v780
    %1088 = vmatpush1.bf16.msra.mxu0 %v779
    %1089 = vmatprep.subr.bf16.mxu0 %v782
    %1090 = vmatpush1.bf16.msra.mxu0 %v781
    %1091 = vmatprep.subr.bf16.mxu0 %v784
    %1092 = vmatpush1.bf16.msra.mxu0 %v783
    %1093 = vmatprep.mubr.bf16.mxu0 %v103
    %1094 = vmatmul.mubr.bf16.gmra.mrb[0].mxu0 %v102
    %v1095 = vpop.f32.mrb[0].mxu0
    %v1096 = vadd.f32 %v1055, %v1095
    %v1097 = vpop.f32.mrb[0].mxu0
    %v1098 = vadd.f32 %v1057, %v1097
    %v1099 = vpop.f32.mrb[0].mxu0
    %v1100 = vpop.f32.mrb[0].mxu0
    %1101 = vdwg.mxu0
    %1102 = vmatprep.subr.bf16.mxu0 %v786
    %1103 = vmatpush1.bf16.msra.mxu0 %v785
    %1104 = vmatprep.subr.bf16.mxu0 %v788
    %1105 = vmatpush1.bf16.msra.mxu0 %v787
    %1106 = vmatprep.subr.bf16.mxu0 %v790
    %1107 = vmatpush1.bf16.msra.mxu0 %v789
    %1108 = vmatprep.subr.bf16.mxu0 %v936
    %1109 = vmatpush1.bf16.msra.mxu0 %v933
    %1110 = vmatprep.subr.bf16.mxu0 0
    %1111 = vmatpush1.bf16.msra.mxu0 0
    %1112 = vmatprep.subr.bf16.mxu0 0
    %1113 = vmatpush1.bf16.msra.mxu0 0
    %1114 = vmatprep.subr.bf16.mxu0 0
    %1115 = vmatpush1.bf16.msra.mxu0 0
    %1116 = vmatprep.subr.bf16.mxu0 0
    %1117 = vmatpush1.bf16.msra.mxu0 0
    %1118 = vmatprep.subr.bf16.mxu0 0
    %1119 = vmatpush1.bf16.msra.mxu0 0
    %1120 = vmatprep.subr.bf16.mxu0 0
    %1121 = vmatpush1.bf16.msra.mxu0 0
    %1122 = vmatprep.subr.bf16.mxu0 0
    %1123 = vmatpush1.bf16.msra.mxu0 0
    %1124 = vmatprep.subr.bf16.mxu0 0
    %1125 = vmatpush1.bf16.msra.mxu0 0
    %1126 = vmatprep.subr.bf16.mxu0 0
    %1127 = vmatpush1.bf16.msra.mxu0 0
    %1128 = vmatprep.subr.bf16.mxu0 0
    %1129 = vmatpush1.bf16.msra.mxu0 0
    %1130 = vmatprep.subr.bf16.mxu0 0
    %1131 = vmatpush1.bf16.msra.mxu0 0
    %1132 = vmatprep.subr.bf16.mxu0 0
    %1133 = vmatpush1.bf16.msra.mxu0 0
    %1134 = vmatprep.mubr.bf16.mxu0 0
    %1135 = vmatmul.mubr.bf16.gmra.mrb[0].mxu0 %v929
    %v1136 = vpop.f32.mrb[0].mxu0
    %v1137 = vadd.f32 %v1096, %v1136
    %v1138 = vpop.f32.mrb[0].mxu0
    %v1139 = vadd.f32 %v1098, %v1138
    %v1140 = vpop.f32.mrb[0].mxu0
    %v1141 = vpop.f32.mrb[0].mxu0
    %1142 = vdwg.mxu0
    %v1143 = vmul.f32 %v1137, 0.2
    %v1144 = vmul.f32 %v1139, 0.2
    %v1145 = vmax.f32 %v1137, %v1143
    %v1146 = vmax.f32 %v1139, %v1144
    %v1147 = vpack.c.bf16 %v1145, %v1145
    %v1148 = vpack.c.bf16 %v1146, %v1146
    %v1149 = vld [vmem:[#allocation7] sm:$0xf]
    %v1150 = vld [vmem:[#allocation7 + $0x4] sm:$0xf]
    %v1151 = vld [vmem:[#allocation7 + $0x8] sm:$0xf]
    %v1152 = vld [vmem:[#allocation7 + $0xc] sm:$0xf]
    %v1153 = vld [vmem:[#allocation7 + $0x10] sm:$0xf]
    %v1154 = vld [vmem:[#allocation7 + $0x14] sm:$0xf]
    %v1155 = vld [vmem:[#allocation7 + $0x18] sm:$0xf]
    %v1156 = vld [vmem:[#allocation7 + $0x1c] sm:$0xf]
    %v1157 = vld [vmem:[#allocation7 + $0x20] sm:$0xf]
    %v1158 = vld [vmem:[#allocation7 + $0x24] sm:$0xf]
    %v1159 = vld [vmem:[#allocation7 + $0x28] sm:$0xf]
    %v1160 = vld [vmem:[#allocation7 + $0x2c] sm:$0xf]
    %v1161 = vld [vmem:[#allocation7 + $0x30] sm:$0xf]
    %v1162 = vld [vmem:[#allocation7 + $0x34] sm:$0xf]
    %v1163 = vld [vmem:[#allocation7 + $0x38] sm:$0xf]
    %v1164 = vld [vmem:[#allocation7 + $0x3c] sm:$0xf]
    %v1165 = vld [vmem:[#allocation7 + $0x40] sm:$0xf]
    %v1166 = vld [vmem:[#allocation7 + $0x44] sm:$0xf]
    %v1167 = vld [vmem:[#allocation7 + $0x48] sm:$0xf]
    %v1168 = vld [vmem:[#allocation7 + $0x4c] sm:$0xf]
    %v1169 = vld [vmem:[#allocation7 + $0x50] sm:$0xf]
    %v1170 = vld [vmem:[#allocation7 + $0x54] sm:$0xf]
    %v1171 = vld [vmem:[#allocation7 + $0x58] sm:$0xf]
    %v1172 = vld [vmem:[#allocation7 + $0x5c] sm:$0xf]
    %v1173 = vld [vmem:[#allocation7 + $0x60] sm:$0xf]
    %v1174 = vld [vmem:[#allocation7 + $0x64] sm:$0xf]
    %v1175 = vld [vmem:[#allocation7 + $0x68] sm:$0xf]
    %v1176 = vld [vmem:[#allocation7 + $0x6c] sm:$0xf]
    %v1177 = vld [vmem:[#allocation7 + $0x70] sm:$0xf]
    %v1178 = vld [vmem:[#allocation7 + $0x74] sm:$0xf]
    %v1179 = vld [vmem:[#allocation7 + $0x78] sm:$0xf]
    %v1180 = vld [vmem:[#allocation7 + $0x7c] sm:$0xf]
    %v1181 = vld [vmem:[%s4] sm:$0x1]
    %v1183 = vlaneseq
    %v1184 = vshrl.u32 %v1183, 7
    %v1185 = vsub.s32 0, %v1184
    %v1186 = vrot.slane %v1181, %v1185
    %v1220 = vunpack.c.l.b16 %v1149
    %v1221 = vunpack.c.l.b16 %v1150
    %v1222 = vunpack.c.l.b16 %v1151
    %v1223 = vunpack.c.l.b16 %v1152
    %v1224 = vunpack.c.l.b16 %v1153
    %v1225 = vunpack.c.l.b16 %v1154
    %v1226 = vunpack.c.l.b16 %v1155
    %v1227 = vunpack.c.l.b16 %v1156
    %v1228 = vunpack.c.l.b16 %v1157
    %v1229 = vunpack.c.l.b16 %v1158
    %v1230 = vunpack.c.l.b16 %v1159
    %v1231 = vunpack.c.l.b16 %v1160
    %v1232 = vunpack.c.l.b16 %v1161
    %v1233 = vunpack.c.l.b16 %v1162
    %v1234 = vunpack.c.l.b16 %v1163
    %v1235 = vunpack.c.l.b16 %v1164
    %v1236 = vunpack.c.l.b16 %v1165
    %v1237 = vunpack.c.l.b16 %v1166
    %v1238 = vunpack.c.l.b16 %v1167
    %v1239 = vunpack.c.l.b16 %v1168
    %v1240 = vunpack.c.l.b16 %v1169
    %v1241 = vunpack.c.l.b16 %v1170
    %v1242 = vunpack.c.l.b16 %v1171
    %v1243 = vunpack.c.l.b16 %v1172
    %v1244 = vunpack.c.l.b16 %v1173
    %v1245 = vunpack.c.l.b16 %v1174
    %v1246 = vunpack.c.l.b16 %v1175
    %v1247 = vunpack.c.l.b16 %v1176
    %v1248 = vunpack.c.l.b16 %v1177
    %v1249 = vunpack.c.l.b16 %v1178
    %v1250 = vunpack.c.l.b16 %v1179
    %v1251 = vunpack.c.l.b16 %v1180
    %v1252 = vpack.c.b16 %v1221, %v1220
    %v1253 = vpack.c.b16 %v1223, %v1222
    %v1254 = vpack.c.b16 %v1225, %v1224
    %v1255 = vpack.c.b16 %v1227, %v1226
    %v1256 = vpack.c.b16 %v1229, %v1228
    %v1257 = vpack.c.b16 %v1231, %v1230
    %v1258 = vpack.c.b16 %v1233, %v1232
    %v1259 = vpack.c.b16 %v1235, %v1234
    %v1260 = vpack.c.b16 %v1237, %v1236
    %v1261 = vpack.c.b16 %v1239, %v1238
    %v1262 = vpack.c.b16 %v1241, %v1240
    %v1263 = vpack.c.b16 %v1243, %v1242
    %v1264 = vpack.c.b16 %v1245, %v1244
    %v1265 = vpack.c.b16 %v1247, %v1246
    %v1266 = vpack.c.b16 %v1249, %v1248
    %v1267 = vpack.c.b16 %v1251, %v1250
    %1284 = vmatprep.subr.bf16.mxu0 0
    %1285 = vmatpush1.bf16.msra.mxu0 %v1252
    %1286 = vmatprep.subr.bf16.mxu0 0
    %1287 = vmatpush1.bf16.msra.mxu0 %v1253
    %1288 = vmatprep.subr.bf16.mxu0 0
    %1289 = vmatpush1.bf16.msra.mxu0 %v1254
    %1290 = vmatprep.subr.bf16.mxu0 0
    %1291 = vmatpush1.bf16.msra.mxu0 %v1255
    %1292 = vmatprep.subr.bf16.mxu0 0
    %1293 = vmatpush1.bf16.msra.mxu0 %v1256
    %1294 = vmatprep.subr.bf16.mxu0 0
    %1295 = vmatpush1.bf16.msra.mxu0 %v1257
    %1296 = vmatprep.subr.bf16.mxu0 0
    %1297 = vmatpush1.bf16.msra.mxu0 %v1258
    %1298 = vmatprep.subr.bf16.mxu0 0
    %1299 = vmatpush1.bf16.msra.mxu0 %v1259
    %1300 = vmatprep.subr.bf16.mxu0 0
    %1301 = vmatpush1.bf16.msra.mxu0 %v1260
    %1302 = vmatprep.subr.bf16.mxu0 0
    %1303 = vmatpush1.bf16.msra.mxu0 %v1261
    %1304 = vmatprep.subr.bf16.mxu0 0
    %1305 = vmatpush1.bf16.msra.mxu0 %v1262
    %1306 = vmatprep.subr.bf16.mxu0 0
    %1307 = vmatpush1.bf16.msra.mxu0 %v1263
    %1308 = vmatprep.subr.bf16.mxu0 0
    %1309 = vmatpush1.bf16.msra.mxu0 %v1264
    %1310 = vmatprep.subr.bf16.mxu0 0
    %1311 = vmatpush1.bf16.msra.mxu0 %v1265
    %1312 = vmatprep.subr.bf16.mxu0 0
    %1313 = vmatpush1.bf16.msra.mxu0 %v1266
    %1314 = vmatprep.subr.bf16.mxu0 0
    %1315 = vmatpush1.bf16.msra.mxu0 %v1267
    %1316 = vmatprep.mubr.bf16.mxu0 %v1148
    %1317 = vmatmul.mubr.bf16.gmra.mrb[0].mxu0 %v1147
    %v1318 = vpop.f32.mrb[0].mxu0
    %v1319 = vadd.f32 %v1186, %v1318
    %v1320 = vpop.f32.mrb[0].mxu0
    %v1321 = vpop.f32.mrb[0].mxu0
    %v1322 = vpop.f32.mrb[0].mxu0
    %1323 = vdwg.mxu0
    %v1324 = vmul.f32 %v1319, 0.2
    %v1325 = vmax.f32 %v1319, %v1324
    %v1326 = vpack.c.bf16 %v1325, %v1325
    %v1327 = vld [vmem:[#allocation8] sm:$0xf]
    %v1328 = vld [vmem:[#allocation8 + $0x4] sm:$0xf]
    %v1329 = vld [vmem:[#allocation8 + $0x8] sm:$0xf]
    %v1330 = vld [vmem:[#allocation8 + $0xc] sm:$0xf]
    %v1331 = vld [vmem:[#allocation8 + $0x10] sm:$0xf]
    %v1332 = vld [vmem:[#allocation8 + $0x14] sm:$0xf]
    %v1333 = vld [vmem:[#allocation8 + $0x18] sm:$0xf]
    %v1334 = vld [vmem:[#allocation8 + $0x1c] sm:$0xf]
    %v1335 = vld [vmem:[#allocation8 + $0x20] sm:$0xf]
    %v1336 = vld [vmem:[#allocation8 + $0x24] sm:$0xf]
    %v1337 = vld [vmem:[#allocation8 + $0x28] sm:$0xf]
    %v1338 = vld [vmem:[#allocation8 + $0x2c] sm:$0xf]
    %v1339 = vld [vmem:[#allocation8 + $0x30] sm:$0xf]
    %v1340 = vld [vmem:[#allocation8 + $0x34] sm:$0xf]
    %v1341 = vld [vmem:[#allocation8 + $0x38] sm:$0xf]
    %v1342 = vld [vmem:[#allocation8 + $0x3c] sm:$0xf]
    %v1343 = vld [vmem:[%s6] sm:$0x1]
    %v1345 = vlaneseq
    %v1346 = vshrl.u32 %v1345, 7
    %v1347 = vsub.s32 0, %v1346
    %v1348 = vrot.slane %v1343, %v1347
    %v1366 = vunpack.c.l.b16 %v1327
    %v1367 = vunpack.c.l.b16 %v1328
    %v1368 = vunpack.c.l.b16 %v1329
    %v1369 = vunpack.c.l.b16 %v1330
    %v1370 = vunpack.c.l.b16 %v1331
    %v1371 = vunpack.c.l.b16 %v1332
    %v1372 = vunpack.c.l.b16 %v1333
    %v1373 = vunpack.c.l.b16 %v1334
    %v1374 = vunpack.c.l.b16 %v1335
    %v1375 = vunpack.c.l.b16 %v1336
    %v1376 = vunpack.c.l.b16 %v1337
    %v1377 = vunpack.c.l.b16 %v1338
    %v1378 = vunpack.c.l.b16 %v1339
    %v1379 = vunpack.c.l.b16 %v1340
    %v1380 = vunpack.c.l.b16 %v1341
    %v1381 = vunpack.c.l.b16 %v1342
    %v1382 = vpack.c.b16 %v1367, %v1366
    %v1383 = vpack.c.b16 %v1369, %v1368
    %v1384 = vpack.c.b16 %v1371, %v1370
    %v1385 = vpack.c.b16 %v1373, %v1372
    %v1386 = vpack.c.b16 %v1375, %v1374
    %v1387 = vpack.c.b16 %v1377, %v1376
    %v1388 = vpack.c.b16 %v1379, %v1378
    %v1389 = vpack.c.b16 %v1381, %v1380
    %1398 = vmatprep.subr.bf16.mxu0 0
    %1399 = vmatpush1.bf16.msra.mxu0 %v1382
    %1400 = vmatprep.subr.bf16.mxu0 0
    %1401 = vmatpush1.bf16.msra.mxu0 %v1383
    %1402 = vmatprep.subr.bf16.mxu0 0
    %1403 = vmatpush1.bf16.msra.mxu0 %v1384
    %1404 = vmatprep.subr.bf16.mxu0 0
    %1405 = vmatpush1.bf16.msra.mxu0 %v1385
    %1406 = vmatprep.subr.bf16.mxu0 0
    %1407 = vmatpush1.bf16.msra.mxu0 %v1386
    %1408 = vmatprep.subr.bf16.mxu0 0
    %1409 = vmatpush1.bf16.msra.mxu0 %v1387
    %1410 = vmatprep.subr.bf16.mxu0 0
    %1411 = vmatpush1.bf16.msra.mxu0 %v1388
    %1412 = vmatprep.subr.bf16.mxu0 0
    %1413 = vmatpush1.bf16.msra.mxu0 %v1389
    %1414 = vmatprep.subr.bf16.mxu0 0
    %1415 = vmatpush1.bf16.msra.mxu0 0
    %1416 = vmatprep.subr.bf16.mxu0 0
    %1417 = vmatpush1.bf16.msra.mxu0 0
    %1418 = vmatprep.subr.bf16.mxu0 0
    %1419 = vmatpush1.bf16.msra.mxu0 0
    %1420 = vmatprep.subr.bf16.mxu0 0
    %1421 = vmatpush1.bf16.msra.mxu0 0
    %1422 = vmatprep.subr.bf16.mxu0 0
    %1423 = vmatpush1.bf16.msra.mxu0 0
    %1424 = vmatprep.subr.bf16.mxu0 0
    %1425 = vmatpush1.bf16.msra.mxu0 0
    %1426 = vmatprep.subr.bf16.mxu0 0
    %1427 = vmatpush1.bf16.msra.mxu0 0
    %1428 = vmatprep.subr.bf16.mxu0 0
    %1429 = vmatpush1.bf16.msra.mxu0 0
    %1430 = vmatprep.mubr.bf16.mxu0 0
    %1431 = vmatmul.mubr.bf16.gmra.mrb[0].mxu0 %v1326
    %v1432 = vpop.f32.mrb[0].mxu0
    %v1433 = vadd.f32 %v1348, %v1432
    %v1434 = vpop.f32.mrb[0].mxu0
    %v1435 = vpop.f32.mrb[0].mxu0
    %v1436 = vpop.f32.mrb[0].mxu0
    %1437 = vdwg.mxu0
    %v1438 = vmul.f32 %v1433, 0.2
    %v1439 = vmax.f32 %v1433, %v1438
    %v1440 = vld [vmem:[%s7] sm:$0x1]
    %v1441 = vpack.c.bf16 %v1439, %v1439
    %v1442 = vld [vmem:[%s8] sm:$0x3]
    %1444 = vset.pattern.permute.xlu0 0
    %1445 = vperm.xlu0 %1444, %v1442
    %v1446 = vpop.permute.xlu0 %1445
    %1448 = vmatprep.subr.bf16.mxu0 0
    %1449 = vmatpush1.bf16.xpose.msra.mxu0 %v1441
    %1450 = vmatprep.subr.bf16.mxu0 0
    %1451 = vmatpush1.bf16.xpose.msra.mxu0 0
    %1452 = vmatprep.subr.bf16.mxu0 0
    %1453 = vmatpush1.bf16.xpose.msra.mxu0 0
    %1454 = vmatprep.subr.bf16.mxu0 0
    %1455 = vmatpush1.bf16.xpose.msra.mxu0 0
    %1456 = vmatprep.subr.bf16.mxu0 0
    %1457 = vmatpush1.bf16.xpose.msra.mxu0 0
    %1458 = vmatprep.subr.bf16.mxu0 0
    %1459 = vmatpush1.bf16.xpose.msra.mxu0 0
    %1460 = vmatprep.subr.bf16.mxu0 0
    %1461 = vmatpush1.bf16.xpose.msra.mxu0 0
    %1462 = vmatprep.subr.bf16.mxu0 0
    %1463 = vmatpush1.bf16.xpose.msra.mxu0 0
    %1464 = vmatprep.subr.bf16.mxu0 0
    %1465 = vmatpush1.bf16.xpose.msra.mxu0 0
    %1466 = vmatprep.subr.bf16.mxu0 0
    %1467 = vmatpush1.bf16.xpose.msra.mxu0 0
    %1468 = vmatprep.subr.bf16.mxu0 0
    %1469 = vmatpush1.bf16.xpose.msra.mxu0 0
    %1470 = vmatprep.subr.bf16.mxu0 0
    %1471 = vmatpush1.bf16.xpose.msra.mxu0 0
    %1472 = vmatprep.subr.bf16.mxu0 0
    %1473 = vmatpush1.bf16.xpose.msra.mxu0 0
    %1474 = vmatprep.subr.bf16.mxu0 0
    %1475 = vmatpush1.bf16.xpose.msra.mxu0 0
    %1476 = vmatprep.subr.bf16.mxu0 0
    %1477 = vmatpush1.bf16.xpose.msra.mxu0 0
    %1478 = vmatprep.subr.bf16.mxu0 0
    %1479 = vmatpush1.bf16.xpose.msra.mxu0 0
    %1480 = vmatprep.mubr.bf16.mxu0 0
    %1481 = vmatmul.mubr.bf16.gmra.mrb[0].mxu0 %v1440
    %v1482 = vpop.f32.mrb[0].mxu0
    %v1483 = vadd.f32 %v1446, %v1482
    %v1484 = vpop.f32.mrb[0].mxu0
    %v1485 = vpop.f32.mrb[0].mxu0
    %v1486 = vpop.f32.mrb[0].mxu0
    %1487 = vdwg.mxu0
    %vm1488 = vcmask 58368
    %1489 = vst.msk [vmem:[#allocation10] sm:$0x3] %vm1488, %v1483
    // Predicated region
    $region54: #{tpu_custom_call.1} parent=1 // pred_check
      _
    $region55: #{tpu_custom_call.1} parent=1 // pred_check_branch
      %1491 = sbr.rel (0) target = $region57
    $region56: #{tpu_custom_call.1} parent=1 // pred_region
      %s1493 = ssub.s32 32, 32
      %1494 = vsyncadd [#allocation4], %s1493
      %s1496 = sshll.u32 [#allocation10], 4
      %s1497 = int_to_ptr.vmem [resolvable:$true] %s1496
      %1499 = dma.vmem_to_hbm [thread:$0]  %s1497, 32, %s9, [#allocation4]
    $region57: #{tpu_custom_call.1} parent=1 // pred_fallthru
      _
    // Predicated region
    $region58: #{tpu_custom_call.1} parent=1 // pred_check
      _
    $region59: #{tpu_custom_call.1} parent=1 // pred_check_branch
      %1501 = sbr.rel (0) target = $region61
    $region60: #{tpu_custom_call.1} parent=1 // pred_region
      %1502 = dma.done [#allocation4], 32
    $region61: #{tpu_custom_call.1} parent=1 // pred_fallthru
      _
    %1503 = vsyncpa [#allocation3], 1
    %1504 = vsyncpa [#allocation6], 1
    %1505 = vsyncpa [#allocation9], 1
    %1506 = vsyncpa [#allocation4], 1

</llo_original>
